<compile_context>
chip_gen: v7x
topology: tpu7x:2x2x1
jax: 0.10.0
libtpu: 0.0.40
codegen_flags: <defaults>
</compile_context>

<pallas_src>
import jax
import jax.numpy as jnp
import numpy as np
from jax.experimental import pallas as pl
from jax.experimental.pallas import tpu as pltpu


def _crierition_kernel(meta_ref, logits_ref, out_ref):
    """meta_ref: [6, T] f32 (rows: pnt_x, pnt_y, tgt_x, tgt_y, weight, class_id)
       logits_ref: [C1, T] native dtype
       out_ref: [1, 3, T] f32 per-chunk partial sums (sq_err, w*nll, w)."""
    s = pl.program_id(1)

    @pl.when(s == 0)
    def _init():
        out_ref[...] = jnp.zeros_like(out_ref)

    meta = meta_ref[...]                              # [6, T] — single DMA stream
    p = meta[0:2, :]                                  # masked predicted coords
    t = meta[2:4, :]                                  # masked target coords
    w = meta[4:5, :]                                  # per-query CE weight (0 for pad)
    tgt = meta[5:6, :].astype(jnp.int32)              # target class id (exact small ints)

    # ---- regression partial: coords on sublanes, queries on lanes
    d = p - t
    sq = jnp.sum(d * d, axis=0, keepdims=True)        # [1, T]

    # ---- classification partial: classes on sublanes, queries on lanes
    logits = logits_ref[...].astype(jnp.float32)      # [C1, T]
    sel = jax.lax.broadcasted_iota(jnp.int32, logits.shape, 0) == tgt
    logit_t = jnp.sum(jnp.where(sel, logits, 0.0), axis=0, keepdims=True)   # [1, T]
    m = jnp.max(logits, axis=0, keepdims=True)                              # [1, T]
    lse = jnp.log(jnp.sum(jnp.exp(logits - m), axis=0, keepdims=True)) + m  # [1, T]
    nll = lse - logit_t                                                     # [1, T]

    part = jnp.concatenate([sq, w * nll, w], axis=0)   # [3, T]
    out_ref[...] += part[None, :, :]


def crierition_forward(outputs, targets, num_classes, class_weight, loss_weight,
                       *, tile_q=2048):
    pnt_coords = outputs['pnt_coords']                    # [B, N, 2]
    cls_logits = outputs['cls_logits']                    # [B, N, C+1]
    gt_points = targets['gt_points']                      # [B, N, 2] (padded per batch)
    gt_labels = targets['gt_labels'].astype(jnp.int32)    # [B, N]
    gt_nums = targets['gt_nums'].astype(jnp.int32)        # [B]

    B, N, _ = pnt_coords.shape
    C1 = cls_logits.shape[-1]
    Q = B * N

    # TODO(synk): the real Hungarian `matcher` is an external module; we use a
    # deterministic identity matcher (query i <-> GT i for i < gt_nums[b]) and
    # express its gather/scatter as dense masking (plain-JAX layout plumbing).
    q = jnp.arange(N, dtype=jnp.int32)
    match = q[None, :] < gt_nums[:, None]                               # [B, N] bool
    match_p = match.astype(pnt_coords.dtype)[..., None]                 # [B, N, 1]

    pnt_m = pnt_coords * match_p                                        # [B, N, 2]
    tgt_m = gt_points.astype(pnt_coords.dtype) * match_p                # [B, N, 2]
    tgt_cls = jnp.where(match, gt_labels, num_classes).astype(jnp.int32)  # [B, N]
    w_q = class_weight.astype(jnp.float32)[tgt_cls]                       # [B, N]

    def to_lanes(x):  # [B, N, K] -> [K, B*N]  (queries on the 128-lane axis)
        return jnp.moveaxis(x, -1, 0).reshape(x.shape[-1], Q)

    # One packed f32 meta stream + the native-dtype logits stream (2 DMAs/step).
    meta = jnp.concatenate(
        [to_lanes(pnt_m).astype(jnp.float32),
         to_lanes(tgt_m).astype(jnp.float32),
         w_q.reshape(1, Q),
         tgt_cls.astype(jnp.float32).reshape(1, Q)], axis=0)   # [6, Q]
    logits_t = to_lanes(cls_logits)                             # [C1, Q]

    # Tiling: big tiles (multiple of 128), 2 "parallel" super-chunks for v7x.
    q_ceil = -(-Q // 128) * 128
    tile_q = max(128, (min(tile_q, q_ceil) // 128) * 128)
    steps_total = -(-Q // tile_q)
    num_chunks = 2 if steps_total >= 2 else 1
    steps = -(-steps_total // num_chunks)
    q_pad = num_chunks * steps * tile_q
    pad = q_pad - Q
    if pad:
        # Padded queries: coords 0 (no reg contribution), weight 0 (no cls contribution).
        meta = jnp.pad(meta, ((0, 0), (0, pad)))
        logits_t = jnp.pad(logits_t, ((0, 0), (0, pad)))

    parts = pl.pallas_call(
        _crierition_kernel,
        out_shape=jax.ShapeDtypeStruct((num_chunks, 3, tile_q), jnp.float32),
        grid_spec=pltpu.PrefetchScalarGridSpec(
            num_scalar_prefetch=0,
            grid=(num_chunks, steps),
            in_specs=[
                pl.BlockSpec((6, tile_q), lambda c, s: (0, c * steps + s)),
                pl.BlockSpec((C1, tile_q), lambda c, s: (0, c * steps + s)),
            ],
            out_specs=pl.BlockSpec((1, 3, tile_q), lambda c, s: (c, 0, 0)),
        ),
        compiler_params=pltpu.CompilerParams(
            # outer: independent chunks (megacore-shardable on v7x);
            # inner: running accumulation across query tiles.
            dimension_semantics=("parallel", "arbitrary")),
    )(meta, logits_t)

    sums = jnp.sum(parts, axis=(0, 2))   # [3] = (sum_sq, sum(w*nll), sum(w))

    # Final scalar math in the wrapper — faithful to the PyTorch module.
    eps = 1e-8
    num_points = jnp.sum(gt_nums).astype(jnp.float32)
    losses = {
        'loss_reg': sums[0] / (num_points + eps),
        'loss_cls': sums[1] / sums[2],   # F.cross_entropy(weight=w): sum(w*nll)/sum(w)
    }
    return jnp.stack([losses[k] * loss_weight[k] for k in loss_weight if k in losses])


if __name__ == "__main__":
    key = jax.random.PRNGKey(0)
    B, N, num_classes = 2, 144, 4
    C1 = num_classes + 1
    k1, k2, k3, k4 = jax.random.split(key, 4)

    pnt_coords = jax.random.normal(k1, (B, N, 2), dtype=jnp.float32)
    cls_logits = jax.random.normal(k2, (B, N, C1), dtype=jnp.float32)
    gt_points = jax.random.normal(k3, (B, N, 2), dtype=jnp.float32)
    gt_labels = jax.random.randint(k4, (B, N), 0, num_classes).astype(jnp.int32)
    gt_nums = jnp.array([100, 7], dtype=jnp.int32)

    # Deterministic "parameters" of the criterion.
    class_weight = 0.5 + 0.1 * jnp.arange(C1, dtype=jnp.float32)
    loss_weight = {'loss_reg': 2.0, 'loss_cls': 1.5}

    outputs = {'pnt_coords': pnt_coords, 'cls_logits': cls_logits}
    targets = {'gt_points': gt_points, 'gt_labels': gt_labels, 'gt_nums': gt_nums}

    # tile_q=128 so the small test exercises the 2-chunk, multi-step grid.
    out = crierition_forward(outputs, targets, num_classes, class_weight, loss_weight,
                             tile_q=128)
    out = jax.block_until_ready(out)

    # Pure-JAX reference (same identity matching) for a sanity check.
    mask = jnp.arange(N)[None, :] < gt_nums[:, None]
    num_points = jnp.sum(gt_nums).astype(jnp.float32)
    ref_reg = jnp.sum(((pnt_coords - gt_points) ** 2) * mask[..., None]) / (num_points + 1e-8)
    tgt_cls = jnp.where(mask, gt_labels, num_classes)
    logp = jax.nn.log_softmax(cls_logits, axis=-1)
    nll = -jnp.take_along_axis(logp, tgt_cls[..., None], axis=-1)[..., 0]
    w = class_weight[tgt_cls]
    ref_cls = jnp.sum(nll * w) / jnp.sum(w)
    ref = jnp.stack([ref_reg * loss_weight['loss_reg'], ref_cls * loss_weight['loss_cls']])

    assert np.allclose(np.asarray(out), np.asarray(ref), rtol=1e-5, atol=1e-5), (out, ref)
    print("KERNEL_OK")
</pallas_src>

<mosaic_0001>
module attributes {stable_mosaic.version = 11 : i64} {
  func.func @_crierition_kernel(%arg0: i32, %arg1: i32, %arg2: memref<6x128xf32, #tpu.memory_space<vmem>>, %arg3: memref<5x128xf32, #tpu.memory_space<vmem>>, %arg4: memref<1x3x128xf32, #tpu.memory_space<vmem>>) attributes {dimension_semantics = [#tpu.dimension_semantics<parallel>, #tpu.dimension_semantics<arbitrary>], iteration_bounds = array<i64: 2, 2>, scalar_prefetch = 0 : i64, scratch_operands = 0 : i64, tpu.core_type = #tpu.core_type<tc>, window_params = [{transform_indices = @transform_0, window_bounds = array<i64: 6, 128>}, {transform_indices = @transform_1, window_bounds = array<i64: 5, 128>}, {transform_indices = @transform_2, window_bounds = array<i64: 1, 3, 128>}]} {
    %c0_i32 = arith.constant 0 : i32
    %0 = arith.cmpi eq, %arg1, %c0_i32 : i32
    %1 = arith.extui %0 : i1 to i32
    %c0_i32_0 = arith.constant 0 : i32
    %2 = arith.cmpi ne, %1, %c0_i32_0 : i32
    scf.if %2 {
      %cst_14 = arith.constant 0.000000e+00 : f32
      %37 = vector.broadcast %cst_14 : f32 to vector<1x3x128xf32>
      %c0_15 = arith.constant 0 : index
      %c0_16 = arith.constant 0 : index
      %c0_17 = arith.constant 0 : index
      %38 = vector.load %arg4[%c0_15, %c0_16, %c0_17] : memref<1x3x128xf32, #tpu.memory_space<vmem>>, vector<1x3x128xf32>
      tpu.vector_store %arg4[%c0_15, %c0_16, %c0_17], %37 {strides = array<i32>} : memref<1x3x128xf32, #tpu.memory_space<vmem>>, vector<1x3x128xf32>,
    } else {
    }
    %c0 = arith.constant 0 : index
    %c0_1 = arith.constant 0 : index
    %3 = vector.load %arg2[%c0, %c0_1] : memref<6x128xf32, #tpu.memory_space<vmem>>, vector<6x128xf32>
    %4 = vector.extract_strided_slice %3 {offsets = [0, 0], sizes = [2, 128], strides = [1, 1]} : vector<6x128xf32> to vector<2x128xf32>
    %5 = vector.extract_strided_slice %3 {offsets = [2, 0], sizes = [2, 128], strides = [1, 1]} : vector<6x128xf32> to vector<2x128xf32>
    %6 = vector.extract_strided_slice %3 {offsets = [4, 0], sizes = [1, 128], strides = [1, 1]} : vector<6x128xf32> to vector<1x128xf32>
    %7 = vector.extract_strided_slice %3 {offsets = [5, 0], sizes = [1, 128], strides = [1, 1]} : vector<6x128xf32> to vector<1x128xf32>
    %8 = arith.fptosi %7 : vector<1x128xf32> to vector<1x128xi32>
    %9 = arith.subf %4, %5 : vector<2x128xf32>
    %10 = arith.mulf %9, %9 : vector<2x128xf32>
    %cst = arith.constant dense<0.000000e+00> : vector<128xf32>
    %11 = vector.multi_reduction <add>, %10, %cst [0] : vector<2x128xf32> to vector<128xf32>
    %12 = vector.shape_cast %11 : vector<128xf32> to vector<1x128xf32>
    %c0_2 = arith.constant 0 : index
    %c0_3 = arith.constant 0 : index
    %13 = vector.load %arg3[%c0_2, %c0_3] : memref<5x128xf32, #tpu.memory_space<vmem>>, vector<5x128xf32>
    %14 = tpu.iota {dimensions = array<i32: 0>} : vector<5x128xi32>
    %15 = vector.broadcast %8 : vector<1x128xi32> to vector<5x128xi32>
    %16 = arith.cmpi eq, %14, %15 : vector<5x128xi32>
    %cst_4 = arith.constant 0.000000e+00 : f32
    %17 = vector.broadcast %cst_4 : f32 to vector<5x128xf32>
    %18 = arith.select %16, %13, %17 : vector<5x128xi1>, vector<5x128xf32>
    %cst_5 = arith.constant dense<0.000000e+00> : vector<128xf32>
    %19 = vector.multi_reduction <add>, %18, %cst_5 [0] : vector<5x128xf32> to vector<128xf32>
    %20 = vector.shape_cast %19 : vector<128xf32> to vector<1x128xf32>
    %cst_6 = arith.constant dense<0xFF800000> : vector<128xf32>
    %21 = vector.multi_reduction <maximumf>, %13, %cst_6 [0] : vector<5x128xf32> to vector<128xf32>
    %22 = vector.shape_cast %21 : vector<128xf32> to vector<1x128xf32>
    %23 = vector.broadcast %22 : vector<1x128xf32> to vector<5x128xf32>
    %24 = arith.subf %13, %23 : vector<5x128xf32>
    %25 = math.exp %24 : vector<5x128xf32>
    %cst_7 = arith.constant dense<0.000000e+00> : vector<128xf32>
    %26 = vector.multi_reduction <add>, %25, %cst_7 [0] : vector<5x128xf32> to vector<128xf32>
    %27 = vector.shape_cast %26 : vector<128xf32> to vector<1x128xf32>
    %28 = math.log %27 : vector<1x128xf32>
    %29 = arith.addf %28, %22 : vector<1x128xf32>
    %30 = arith.subf %29, %20 : vector<1x128xf32>
    %31 = arith.mulf %6, %30 : vector<1x128xf32>
    %32 = tpu.concatenate %12, %31, %6 in 0 : vector<1x128xf32>, vector<1x128xf32>, vector<1x128xf32> -> vector<3x128xf32>
    %c0_8 = arith.constant 0 : index
    %c0_9 = arith.constant 0 : index
    %c0_10 = arith.constant 0 : index
    %33 = vector.load %arg4[%c0_8, %c0_9, %c0_10] : memref<1x3x128xf32, #tpu.memory_space<vmem>>, vector<1x3x128xf32>
    %34 = vector.shape_cast %32 : vector<3x128xf32> to vector<1x3x128xf32>
    %35 = arith.addf %33, %34 : vector<1x3x128xf32>
    %c0_11 = arith.constant 0 : index
    %c0_12 = arith.constant 0 : index
    %c0_13 = arith.constant 0 : index
    %36 = vector.load %arg4[%c0_11, %c0_12, %c0_13] : memref<1x3x128xf32, #tpu.memory_space<vmem>>, vector<1x3x128xf32>
    tpu.vector_store %arg4[%c0_11, %c0_12, %c0_13], %35 {strides = array<i32>} : memref<1x3x128xf32, #tpu.memory_space<vmem>>, vector<1x3x128xf32>,
    return
  }
  func.func @transform_0(%arg0: i32, %arg1: i32) -> (i32, i32) {
    %c2_i32 = arith.constant 2 : i32
    %0 = arith.muli %arg0, %c2_i32 : i32
    %1 = arith.addi %0, %arg1 : i32
    %c0_i32 = arith.constant 0 : i32
    %c0_i32_0 = arith.constant 0 : i32
    return %c0_i32, %1 : i32, i32
  }
  func.func @transform_1(%arg0: i32, %arg1: i32) -> (i32, i32) {
    %c2_i32 = arith.constant 2 : i32
    %0 = arith.muli %arg0, %c2_i32 : i32
    %1 = arith.addi %0, %arg1 : i32
    %c0_i32 = arith.constant 0 : i32
    %c0_i32_0 = arith.constant 0 : i32
    return %c0_i32, %1 : i32, i32
  }
  func.func @transform_2(%arg0: i32, %arg1: i32) -> (i32, i32, i32) {
    %c0_i32 = arith.constant 0 : i32
    %c0_i32_0 = arith.constant 0 : i32
    %c0_i32_1 = arith.constant 0 : i32
    return %arg0, %c0_i32, %c0_i32_0 : i32, i32, i32
  }
}

</mosaic_0001>

<llo_original>
// kernel: tpu_custom_call.1
$region0: #{tpu_custom_call.1}
  #allocation0 [shape = 'u32[]', space=smem, size = 0x4, offset = 0x4, fixed_abs, tag = 'smem constant byte address 0x4 - core index']
  #allocation1 [shape = 'u32[144,128]{1,0:T(1,128)}', space=vmem, size = 0x12000, scoped, tag = 'internal scratch']
  %s0 = inlined_call_operand.hbm [shape: f32[6,512], index: 0, kind: input, shape index: {}]
  %s1 = inlined_call_operand.hbm [shape: f32[5,512], index: 1, kind: input, shape index: {}]
  %s2 = inlined_call_operand.vmem [shape: f32[2,3,128], index: 2, kind: output, shape index: {}]
  %s3 = sld [smem:[#allocation0]]
  $region53: #{tpu_custom_call.1} parent=0
    _
  %s5 = ssub.s32 1, %s3
  %s6 = scalar_select 0, %s5, %s3
  $region1: #{tpu_custom_call.1} parent=0
    #allocation2 [shape = 'u8[8192]{0}', space=vmem, size = 0x2000, scoped, tag = 'input window, operand 0']
    #allocation3 [shape = 's32[2]{0}', space=sflag, size = 0x8, scoped, tag = 'scoped memory for tpu_custom_call.1']
    #allocation4 [shape = 'u8[8192]{0}', space=vmem, size = 0x2000, scoped, tag = 'input window, operand 1']
    #allocation5 [shape = 's32[2]{0}', space=sflag, size = 0x8, scoped, tag = 'scoped memory for tpu_custom_call.1']
    %7 = vsyncpa [#allocation3], 0
    %s8 = scalar_lea.sflag [#allocation3], 1
    %9 = vsyncpa %s8, 0
    %10 = vsyncpa [#allocation5], 0
    %s11 = scalar_lea.sflag [#allocation5], 1
    %12 = vsyncpa %s11, 0
    loop: start=0, step=1, limit=6
    $region2: #{tpu_custom_call.1} parent=1 // loop_pre_header
      _
    $region3: #{tpu_custom_call.1} parent=1 // loop_header
      %s14 = sphi 0, %s18
      %p15 = scmp.ge.s32.totalorder %s14, 6
      %s21 = sphi 0, %s33
      %s22 = sphi 0, %s29
      %s23 = sphi 0, %s21
      %s24 = sphi 0, %s22
      %s25 = sphi 0, %s23
      %s26 = sphi 0, %s24
      %s40 = sphi 0, %s42
      %s43 = sphi 0, %s40
      %s44 = sphi 0, %s43
      %s60 = sphi 0, %s44
      %s70 = sphi 0, %s72
      %s73 = sphi 0, %s70
      %s74 = sphi 0, %s73
      %s90 = sphi 0, %s74
      %s96 = sphi 0, %s98
      %s99 = sphi 0, %s96
      %s100 = sphi 0, %s99
      %s116 = sphi 0, %s100
    $region4: #{tpu_custom_call.1} parent=1 // loop_header_branch
      %17 = sbr.rel (%p15) target = $region8
    $region5: #{tpu_custom_call.1} parent=1 // loop_body
      %s19 = ssub.s32 %s14, 1
      %s20 = ssub.s32 %s14, 2
      %s27 = sadd.s32 1, %s22
      %p28 = scmp.ge.s32.totalorder %s27, 2
      %s29 = scalar_select %p28, 0, %s27
      %s30 = sadd.s32 1, %s21
      %s31 = scalar_select %p28, %s30, %s21
      %p32 = scmp.ge.s32.totalorder %s31, 2
      %s33 = scalar_select %p32, 0, %s31
      %s34 = smul.u32 %s21, 2
      %s35 = sadd.s32 %s34, %s22
      %s36 = smul.u32 %s33, 2
      %s37 = sadd.s32 %s36, %s29
      %s38 = ssub.s32 %s35, %s37
      %p39 = scmp.eq.s32.totalorder %s38, 0
      %s41 = sadd.s32 %s40, 1
      %s42 = scalar_select %p39, %s40, %s41
      %p45 = pneg %p39
      %p46 = scmp.eq.s32.totalorder %s14, 3
      %p47 = por %p45, %p46
      %p48 = scmp.ne.s32.totalorder %s40, %s43
      %p49 = scmp.eq.s32.totalorder %s14, 0
      %p50 = por %p48, %p49
      %p51 = scmp.ne.s32.totalorder %s40, %s43
      %p52 = scmp.eq.s32.totalorder %s19, 3
      %p53 = por %p51, %p52
      %p54 = scmp.ne.s32.totalorder %s43, %s44
      %p55 = scmp.eq.s32.totalorder %s19, 0
      %p56 = por %p54, %p55
      %p57 = scmp.ne.s32.totalorder %s43, %s44
      %p58 = scmp.eq.s32.totalorder %s20, 3
      %p59 = por %p57, %p58
      %p61 = scmp.ne.s32.totalorder %s44, %s60
      %p62 = scmp.eq.s32.totalorder %s20, 0
      %p63 = por %p61, %p62
      %s64 = smul.u32 %s21, 2
      %s65 = sadd.s32 %s64, %s22
      %s66 = smul.u32 %s33, 2
      %s67 = sadd.s32 %s66, %s29
      %s68 = ssub.s32 %s65, %s67
      %p69 = scmp.eq.s32.totalorder %s68, 0
      %s71 = sadd.s32 %s70, 1
      %s72 = scalar_select %p69, %s70, %s71
      %p75 = pneg %p69
      %p76 = scmp.eq.s32.totalorder %s14, 3
      %p77 = por %p75, %p76
      %p78 = scmp.ne.s32.totalorder %s70, %s73
      %p79 = scmp.eq.s32.totalorder %s14, 0
      %p80 = por %p78, %p79
      %p81 = scmp.ne.s32.totalorder %s70, %s73
      %p82 = scmp.eq.s32.totalorder %s19, 3
      %p83 = por %p81, %p82
      %p84 = scmp.ne.s32.totalorder %s73, %s74
      %p85 = scmp.eq.s32.totalorder %s19, 0
      %p86 = por %p84, %p85
      %p87 = scmp.ne.s32.totalorder %s73, %s74
      %p88 = scmp.eq.s32.totalorder %s20, 3
      %p89 = por %p87, %p88
      %p91 = scmp.ne.s32.totalorder %s74, %s90
      %p92 = scmp.eq.s32.totalorder %s20, 0
      %p93 = por %p91, %p92
      %s94 = ssub.s32 %s21, %s33
      %p95 = scmp.eq.s32.totalorder %s94, 0
      %s97 = sadd.s32 %s96, 1
      %s98 = scalar_select %p95, %s96, %s97
      %p101 = pneg %p95
      %p102 = scmp.eq.s32.totalorder %s14, 3
      %p103 = por %p101, %p102
      %p104 = scmp.ne.s32.totalorder %s96, %s99
      %p105 = scmp.eq.s32.totalorder %s14, 0
      %p106 = por %p104, %p105
      %p107 = scmp.ne.s32.totalorder %s96, %s99
      %p108 = scmp.eq.s32.totalorder %s19, 3
      %p109 = por %p107, %p108
      %p110 = scmp.ne.s32.totalorder %s99, %s100
      %p111 = scmp.eq.s32.totalorder %s19, 0
      %p112 = por %p110, %p111
      %p113 = scmp.ne.s32.totalorder %s99, %s100
      %p114 = scmp.eq.s32.totalorder %s20, 3
      %p115 = por %p113, %p114
      %p117 = scmp.ne.s32.totalorder %s100, %s116
      %p118 = scmp.eq.s32.totalorder %s20, 0
      %p119 = por %p117, %p118
      %p120 = scmp.le.s32.totalorder 1, %s14
      %p121 = scmp.lt.s32.totalorder %s14, 5
      %p122 = pnand %p120, %p121
      %p123 = pneg %p122
      // Predicated region
      $region9: #{tpu_custom_call.1} parent=5 // pred_check
        _
      $region10: #{tpu_custom_call.1} parent=5 // pred_check_branch
        %125 = sbr.rel (%p122) target = $region12
      $region11: #{tpu_custom_call.1} parent=5 // pred_region
        %s126 = ssub.s32 %s14, 1
      $region12: #{tpu_custom_call.1} parent=5 // pred_fallthru
        _
      %p127 = scmp.lt.s32.totalorder %s14, 4
      // Predicated region
      $region13: #{tpu_custom_call.1} parent=5 // pred_check
        %p128 = pneg %p127
      $region14: #{tpu_custom_call.1} parent=5 // pred_check_branch
        %130 = sbr.rel (%p128) target = $region16
      $region15: #{tpu_custom_call.1} parent=5 // pred_region
        // Predicated region
        $region17: #{tpu_custom_call.1} parent=15 // pred_check
          %p131 = pneg %p50
        $region18: #{tpu_custom_call.1} parent=15 // pred_check_branch
          %133 = sbr.rel (%p131) target = $region20
        $region19: #{tpu_custom_call.1} parent=15 // pred_region
          %s134 = sand.u32 %s40, 1
          %s135 = scalar_lea.sflag [#allocation3], %s134
          %s136 = sand.u32 %s40, 1
          %s137 = smul.addr %s136, 8
          %s138 = scalar_lea.vmem [#allocation2], %s137
          %s139 = smul.u32 %s21, 2
          %s140 = sadd.s32 %s139, %s22
          %s142 = ssub.s32 128, 128
          %143 = vsyncadd %s135, %s142
          %s144 = smul.addr %s140, 128
          %s145 = scalar_lea.hbm %s0, %s144
          %s147 = sshll.u32 %s138, 4
          %s148 = int_to_ptr.vmem [resolvable:$true] %s147
          %150 = dma.hbm_to_vmem [thread:$0]  %s145, 128, %s148, %s135
        $region20: #{tpu_custom_call.1} parent=15 // pred_fallthru
          _
        // Predicated region
        $region21: #{tpu_custom_call.1} parent=15 // pred_check
          %p151 = pneg %p80
        $region22: #{tpu_custom_call.1} parent=15 // pred_check_branch
          %153 = sbr.rel (%p151) target = $region24
        $region23: #{tpu_custom_call.1} parent=15 // pred_region
          %s154 = sand.u32 %s70, 1
          %s155 = scalar_lea.sflag [#allocation5], %s154
          %s156 = sand.u32 %s70, 1
          %s157 = smul.addr %s156, 8
          %s158 = scalar_lea.vmem [#allocation4], %s157
          %s159 = smul.u32 %s21, 2
          %s160 = sadd.s32 %s159, %s22
          %s162 = ssub.s32 128, 128
          %163 = vsyncadd %s155, %s162
          %s164 = smul.addr %s160, 128
          %s165 = scalar_lea.hbm %s1, %s164
          %s167 = sshll.u32 %s158, 4
          %s168 = int_to_ptr.vmem [resolvable:$true] %s167
          %170 = dma.hbm_to_vmem [thread:$0]  %s165, 128, %s168, %s155
        $region24: #{tpu_custom_call.1} parent=15 // pred_fallthru
          _
      $region16: #{tpu_custom_call.1} parent=5 // pred_fallthru
        _
      %p171 = scmp.le.s32.totalorder 1, %s14
      %p172 = scmp.lt.s32.totalorder %s14, 5
      %p173 = pnand %p171, %p172
      %p174 = pneg %p173
      // Predicated region
      $region25: #{tpu_custom_call.1} parent=5 // pred_check
        _
      $region26: #{tpu_custom_call.1} parent=5 // pred_check_branch
        %176 = sbr.rel (%p173) target = $region28
      $region27: #{tpu_custom_call.1} parent=5 // pred_region
        %s177 = ssub.s32 %s14, 1
        %s178 = sand.u32 %s43, 1
        %s179 = scalar_lea.sflag [#allocation3], %s178
        %s180 = sand.u32 %s43, 1
        %s181 = smul.addr %s180, 8
        %s182 = scalar_lea.vmem [#allocation2], %s181
        // Predicated region
        $region29: #{tpu_custom_call.1} parent=27 // pred_check
          %p183 = pneg %p56
        $region30: #{tpu_custom_call.1} parent=27 // pred_check_branch
          %185 = sbr.rel (%p183) target = $region32
        $region31: #{tpu_custom_call.1} parent=27 // pred_region
          %186 = dma.done %s179, 128
        $region32: #{tpu_custom_call.1} parent=27 // pred_fallthru
          _
        %s187 = sand.u32 %s73, 1
        %s188 = scalar_lea.sflag [#allocation5], %s187
        %s189 = sand.u32 %s73, 1
        %s190 = smul.addr %s189, 8
        %s191 = scalar_lea.vmem [#allocation4], %s190
        // Predicated region
        $region33: #{tpu_custom_call.1} parent=27 // pred_check
          %p192 = pneg %p86
        $region34: #{tpu_custom_call.1} parent=27 // pred_check_branch
          %194 = sbr.rel (%p192) target = $region36
        $region35: #{tpu_custom_call.1} parent=27 // pred_region
          %195 = dma.done %s188, 128
        $region36: #{tpu_custom_call.1} parent=27 // pred_fallthru
          _
        %s196 = sand.u32 %s43, 1
        %s197 = scalar_lea.sflag [#allocation3], %s196
        %s198 = sand.u32 %s43, 1
        %s199 = smul.addr %s198, 8
        %s200 = scalar_lea.vmem [#allocation2], %s199
        %p201 = pneg %p56
        %p202 = pneg %p53
        %s203 = sand.u32 %s73, 1
        %s204 = scalar_lea.sflag [#allocation5], %s203
        %s205 = sand.u32 %s73, 1
        %s206 = smul.addr %s205, 8
        %s207 = scalar_lea.vmem [#allocation4], %s206
        %p208 = pneg %p86
        %p209 = pneg %p83
        %p210 = pneg %p112
        %p211 = pneg %p109
        %p212 = scmp.lt.s32.totalorder %s23, 1
        %s213 = scalar_select %p212, %s23, 1
        %s214 = smul.addr %s213, 4
        %s215 = scalar_lea.vmem %s2, %s214
        %s216 = smul.u32 %s23, 2
        %s217 = sadd.s32 %s216, %s24
        %s218 = smul.u32 %s23, 2
        %s219 = sadd.s32 %s218, %s24
        %p220 = scmp.lt.s32.totalorder %s23, 1
        %s221 = scalar_select %p220, %s23, 1
        %s222 = smul.addr %s221, 4
        %s223 = scalar_lea.vmem %s2, %s222
        %p224 = scmp.eq.s32.totalorder %s24, 0
        // Predicated region
        $region37: #{tpu_custom_call.1} parent=27 // pred_check
          %p225 = pneg %p224
        $region38: #{tpu_custom_call.1} parent=27 // pred_check_branch
          %227 = sbr.rel (%p225) target = $region40
        $region39: #{tpu_custom_call.1} parent=27 // pred_region
          %228 = vst [vmem:[%s223] sm:$0x7] 0.0
        $region40: #{tpu_custom_call.1} parent=27 // pred_fallthru
          _
        %v229 = vld [vmem:[%s182] sm:$0x3f]
        %v230 = vcvt.f32.s32.to.zero.pseudo %v229
        %v232 = vrot.slane %v229, 2
        %v234 = vsub.f32 %v229, %v232
        %v235 = vmul.f32 %v234, %v234
        %vm236 = vcmask 1041408
        %v237 = vsel %vm236, %v235, 0.0
        %v238 = vrot.slane %v237, 4
        %v239 = vadd.f32 %v237, %v238
        %v240 = vrot.slane %v239, 2
        %v241 = vadd.f32 %v239, %v240
        %v242 = vrot.slane %v241, 1
        %v243 = vadd.f32 %v241, %v242
        %v244 = vld [vmem:[%s191] sm:$0x1f]
        %v245 = vlaneseq
        %v246 = vshrl.u32 %v245, 7
        %v247 = vlaneseq
        %v248 = vshrl.u32 %v247, 7
        %v249 = vsub.s32 5, %v248
        %v250 = vrot.slane %v230, %v249
        %vm251 = vcmp.eq.s32.totalorder %v246, %v250
        %v252 = vsel %vm251, %v244, 0.0
        %vm253 = vcmask 1044480
        %v254 = vsel %vm253, %v252, 0.0
        %v255 = vrot.slane %v254, 4
        %v256 = vadd.f32 %v254, %v255
        %v257 = vrot.slane %v256, 2
        %v258 = vadd.f32 %v256, %v257
        %v259 = vrot.slane %v258, 1
        %v260 = vadd.f32 %v258, %v259
        %v261 = vsel %vm253, %v244, -inf
        %v262 = vrot.slane %v261, 4
        %v263 = vmax.f32 %v261, %v262
        %v264 = vrot.slane %v263, 2
        %v265 = vmax.f32 %v263, %v264
        %v266 = vrot.slane %v265, 1
        %v267 = vmax.f32 %v265, %v266
        %v268 = vsub.f32 %v244, %v267
        %v269 = vmul.f32 %v268, 1.442695
        %v270 = vpow.pop %v269
        %v271 = vsel %vm253, %v270, 0.0
        %v272 = vrot.slane %v271, 4
        %v273 = vadd.f32 %v271, %v272
        %v274 = vrot.slane %v273, 2
        %v275 = vadd.f32 %v273, %v274
        %v276 = vrot.slane %v275, 1
        %v277 = vadd.f32 %v275, %v276
        %v278 = vlog2.pop %v277
        %v279 = vmul.f32 %v278, 0.6931472
        %v280 = vadd.f32 %v279, %v267
        %v281 = vsub.f32 %v280, %v260
        %v282 = vmul.f32 %v229, %v281
        %v284 = vrot.slane %v282, 3
        %vm286 = vcmask 1040384
        %v287 = vsel %vm286, %v243, %v284
        %v288 = vsel %vm236, %v287, %v232
        %v289 = vld [vmem:[%s223] sm:$0x7]
        %v290 = vadd.f32 %v289, %v288
        %291 = vst [vmem:[%s223] sm:$0x7] %v290
        %p292 = scmp.lt.s32.totalorder %s23, 1
        %s293 = scalar_select %p292, %s23, 1
        %s294 = smul.addr %s293, 4
        %s295 = scalar_lea.vmem %s2, %s294
        // Predicated region
        $region41: #{tpu_custom_call.1} parent=27 // pred_check
          %p296 = pneg %p109
        $region42: #{tpu_custom_call.1} parent=27 // pred_check_branch
          %298 = sbr.rel (%p296) target = $region44
        $region43: #{tpu_custom_call.1} parent=27 // pred_region
          _
        $region44: #{tpu_custom_call.1} parent=27 // pred_fallthru
          _
      $region28: #{tpu_custom_call.1} parent=5 // pred_fallthru
        _
      %p299 = scmp.le.s32.totalorder 2, %s14
      // Predicated region
      $region45: #{tpu_custom_call.1} parent=5 // pred_check
        %p300 = pneg %p299
      $region46: #{tpu_custom_call.1} parent=5 // pred_check_branch
        %302 = sbr.rel (%p300) target = $region48
      $region47: #{tpu_custom_call.1} parent=5 // pred_region
        %s303 = ssub.s32 %s14, 2
        // Predicated region
        $region49: #{tpu_custom_call.1} parent=47 // pred_check
          %p304 = pneg %p115
        $region50: #{tpu_custom_call.1} parent=47 // pred_check_branch
          %306 = sbr.rel (%p304) target = $region52
        $region51: #{tpu_custom_call.1} parent=47 // pred_region
          %p307 = scmp.lt.s32.totalorder %s25, 1
          %s308 = scalar_select %p307, %s25, 1
          %s309 = smul.addr %s308, 4
          %s310 = scalar_lea.vmem %s2, %s309
        $region52: #{tpu_custom_call.1} parent=47 // pred_fallthru
          _
      $region48: #{tpu_custom_call.1} parent=5 // pred_fallthru
        _
    $region6: #{tpu_custom_call.1} parent=1 // loop_footer
      %s18 = sadd.s32 1, %s14
    $region7: #{tpu_custom_call.1} parent=1 // loop_footer_branch
      %13 = sbr.rel target = $region3
    $region8: #{tpu_custom_call.1} parent=1 // loop_exit
      _
    %311 = vsyncpa [#allocation3], 1
    %s312 = scalar_lea.sflag [#allocation3], 1
    %313 = vsyncpa %s312, 1
    %314 = vsyncpa [#allocation5], 1
    %s315 = scalar_lea.sflag [#allocation5], 1
    %316 = vsyncpa %s315, 1

</llo_original>
